<compile_context>
chip_gen: v7x
topology: tpu7x:2x2x1
jax: 0.10.0
libtpu: 0.0.40
codegen_flags: <defaults>
</compile_context>

<pallas_src>
import math

import jax
import jax.numpy as jnp
from jax.experimental import pallas as pl
from jax.experimental.pallas import tpu as pltpu

_LANE = 1024          # lane-dense last dim (multiple of 128) -> unmasked stores
_MAX_TILE_ROWS = 512  # 512*1024*4B = 2 MiB f32 tile; 2x(in+out) double-buffered
                      # ~= 8 MiB, safe under default scoped VMEM on v5e/v6e/v7x


def _identity_kernel(x_ref, o_ref):
    # Hot path: pure pass-through, one tile load + one tile store, no VPU/XLU work.
    o_ref[...] = x_ref[...]


def _pallas_identity(x):
    """Tiled, pipelined HBM->HBM identity copy of `x` (any shape / dtype)."""
    total = math.prod(x.shape)

    # Flatten to a lane-dense 2-D view: (rows, _LANE).
    rows = pl.cdiv(total, _LANE)
    tile_rows = min(rows, _MAX_TILE_ROWS)
    padded_rows = pl.cdiv(rows, tile_rows) * tile_rows
    padded_total = padded_rows * _LANE

    flat = x.reshape(-1)
    if padded_total != total:
        flat = jnp.pad(flat, (0, padded_total - total))
    x2 = flat.reshape(padded_rows, _LANE)

    out2 = pl.pallas_call(
        _identity_kernel,
        out_shape=jax.ShapeDtypeStruct((padded_rows, _LANE), x.dtype),
        grid=(padded_rows // tile_rows,),
        in_specs=[pl.BlockSpec((tile_rows, _LANE), lambda i: (i, 0))],
        out_specs=pl.BlockSpec((tile_rows, _LANE), lambda i: (i, 0)),
        # Alias output onto the (wrapper-local) input buffer: halves HBM
        # footprint and lets XLA/Mosaic skip the extra allocation.
        input_output_aliases={0: 0},
        compiler_params=pltpu.CompilerParams(
            dimension_semantics=("parallel",),
        ),
    )(x2)

    return out2.reshape(-1)[:total].reshape(x.shape)


@jax.jit
def nsrt_forward(x):
    """Pallas implementation of NSRT.forward(x) == x.

    Note: the truly optimal path is `return x` (the identity is free); the
    Pallas copy is kept only because a kernel is structurally required.
    """
    return _pallas_identity(x)


if __name__ == "__main__":
    key = jax.random.PRNGKey(0)
    # Small NCHW input consistent with a generic transition-model forward.
    x = jax.random.normal(key, (2, 4, 16, 16), dtype=jnp.float32)

    y = nsrt_forward(x)
    jax.block_until_ready(y)

    assert y.shape == x.shape and y.dtype == x.dtype
    assert bool(jnp.array_equal(y, x))
    print("KERNEL_OK")
</pallas_src>

<mosaic_0001>
module attributes {stable_mosaic.version = 11 : i64} {
  func.func @_identity_kernel(%arg0: i32, %arg1: memref<2x1024xf32, #tpu.memory_space<vmem>>, %arg2: memref<2x1024xf32, #tpu.memory_space<vmem>>) attributes {dimension_semantics = [#tpu.dimension_semantics<parallel>], iteration_bounds = array<i64: 1>, scalar_prefetch = 0 : i64, scratch_operands = 0 : i64, tpu.core_type = #tpu.core_type<tc>, window_params = [{transform_indices = @transform_0, window_bounds = array<i64: 2, 1024>}, {transform_indices = @transform_1, window_bounds = array<i64: 2, 1024>}]} {
    %c0 = arith.constant 0 : index
    %c0_0 = arith.constant 0 : index
    %0 = vector.load %arg1[%c0, %c0_0] : memref<2x1024xf32, #tpu.memory_space<vmem>>, vector<2x1024xf32>
    %c0_1 = arith.constant 0 : index
    %c0_2 = arith.constant 0 : index
    %1 = vector.load %arg2[%c0_1, %c0_2] : memref<2x1024xf32, #tpu.memory_space<vmem>>, vector<2x1024xf32>
    tpu.vector_store %arg2[%c0_1, %c0_2], %0 {strides = array<i32>} : memref<2x1024xf32, #tpu.memory_space<vmem>>, vector<2x1024xf32>,
    return
  }
  func.func @transform_0(%arg0: i32) -> (i32, i32) {
    %c0_i32 = arith.constant 0 : i32
    %c0_i32_0 = arith.constant 0 : i32
    return %arg0, %c0_i32 : i32, i32
  }
  func.func @transform_1(%arg0: i32) -> (i32, i32) {
    %c0_i32 = arith.constant 0 : i32
    %c0_i32_0 = arith.constant 0 : i32
    return %arg0, %c0_i32 : i32, i32
  }
}

</mosaic_0001>

<llo_original>
// kernel: nsrt_forward.1
$region0: #{nsrt_forward.1}
  #allocation0 [shape = 'u32[]', space=smem, size = 0x4, offset = 0x4, fixed_abs, tag = 'smem constant byte address 0x4 - core index']
  #allocation1 [shape = 'u32[144,128]{1,0:T(1,128)}', space=vmem, size = 0x12000, scoped, tag = 'internal scratch']
  %s0 = inlined_call_operand.vmem [shape: f32[2,1024], index: 0, kind: input, shape index: {}, may-alias: {0,1}]
  %s1 = inlined_call_operand.vmem [shape: f32[2,1024], index: 1, kind: output, shape index: {}, may-alias: {0,1}]
  %s2 = sld [smem:[#allocation0]]
  $region14: #{nsrt_forward.1} parent=0
    _
  %s4 = ssub.s32 1, %s2
  %s5 = scalar_select 0, %s4, %s2
  // Predicated region
  $region2: #{nsrt_forward.1} parent=0 // pred_check
    _
  $region3: #{nsrt_forward.1} parent=0 // pred_check_branch
    %7 = sbr.rel (0) target = $region5
  $region4: #{nsrt_forward.1} parent=0 // pred_region
    _
  $region5: #{nsrt_forward.1} parent=0 // pred_fallthru
    _
  %v8 = vld [vmem:[%s0] sm:$0xff]
  %v9 = vld [vmem:[%s0 + $0x8] sm:$0xff]
  %10 = vst [vmem:[%s1] sm:$0xff] %v8
  %11 = vst [vmem:[%s1 + $0x8] sm:$0xff] %v9
  // Predicated region
  $region6: #{nsrt_forward.1} parent=0 // pred_check
    _
  $region7: #{nsrt_forward.1} parent=0 // pred_check_branch
    %13 = sbr.rel (0) target = $region9
  $region8: #{nsrt_forward.1} parent=0 // pred_region
    _
  $region9: #{nsrt_forward.1} parent=0 // pred_fallthru
    _
  // Predicated region
  $region10: #{nsrt_forward.1} parent=0 // pred_check
    _
  $region11: #{nsrt_forward.1} parent=0 // pred_check_branch
    %15 = sbr.rel (0) target = $region13
  $region12: #{nsrt_forward.1} parent=0 // pred_region
    _
  $region13: #{nsrt_forward.1} parent=0 // pred_fallthru
    _

</llo_original>
